<compile_context>
chip_gen: v5e
topology: v5e:2x2
jax: 0.10.0
libtpu: 0.0.40
codegen_flags: <defaults>
</compile_context>

<pallas_src>
import functools

import jax
import jax.numpy as jnp
from jax import lax
from jax.experimental import pallas as pl
from jax.experimental.pallas import tpu as pltpu

_LANES = 128
_TARGET_BLOCK_BYTES = 4 * 1024 * 1024      # ~4 MiB per input block per buffer
_VMEM_LIMIT_BYTES = 40 * 1024 * 1024       # 2 inputs x 3 bufs x 4 MiB = 24 MiB + slack
_INPUT_BUFFERS = 3                         # deeper input pipelining (review item)
_SMALL_FASTPATH_ELEMS = 65536              # below this, fused XLA beats any kernel


def _cdiv(a, b):
    return -(-a // b)


def _round_up(a, m):
    return _cdiv(a, m) * m


def _sublane_mult(dtype):
    # Native packed sublane tile: (8,128) f32, (16,128) bf16/f16, (32,128) int8/fp8.
    return {4: 8, 2: 16, 1: 32}.get(jnp.dtype(dtype).itemsize, 8)


def _sq_diff_rowsum_kernel(p_ref, t_ref, o_ref, *, tile_rows, rows_valid, ragged):
    """out[tile, 0, :] = sum over sublanes of (p - t)^2 for this block.

    `ragged` (static) is True iff the last block extends past the array; the
    out-of-bounds rows (unspecified data) are masked with an iota row index.
    """
    d = p_ref[...].astype(jnp.float32) - t_ref[...].astype(jnp.float32)
    sq = d * d
    if ragged:
        row = (pl.program_id(0) * tile_rows
               + lax.broadcasted_iota(jnp.int32, sq.shape, 0))
        sq = jnp.where(row < rows_valid, sq, 0.0)
    o_ref[...] = jnp.sum(sq, axis=0)[None, None, :]


def _make_in_spec(tile_rows, nbuf):
    """Input BlockSpec; requests 3-deep buffering when supported & useful."""
    if nbuf is not None and hasattr(pl, "Buffered"):
        try:
            return pl.BlockSpec((tile_rows, _LANES), lambda i: (i, 0),
                                pipeline_mode=pl.Buffered(nbuf))
        except TypeError:
            pass
    return pl.BlockSpec((tile_rows, _LANES), lambda i: (i, 0))


def _stream_sq_diff_sum(p, t, max_tile_rows=None):
    """sum((p - t)^2) over all elements of one stream, via a tiled Pallas reduce."""
    n = int(p.size)
    sub = max(_sublane_mult(p.dtype), _sublane_mult(t.dtype))
    itemsize = max(jnp.dtype(p.dtype).itemsize, jnp.dtype(t.dtype).itemsize)

    # Minimal layout plumbing: pad only to a whole sublane tile (<= sub*128-1
    # elements of zeros -> (p - t) == 0 there), NOT to a whole grid block.
    rows_valid = _round_up(_cdiv(n, _LANES), sub)

    if max_tile_rows is None:
        max_rows = _TARGET_BLOCK_BYTES // (_LANES * itemsize)
    else:
        max_rows = int(max_tile_rows)
    max_rows = max(sub, (max_rows // sub) * sub)

    tile_rows = min(max_rows, rows_valid)
    num_tiles = _cdiv(rows_valid, tile_rows)
    ragged = (rows_valid % tile_rows) != 0

    def to_tiles(x):
        flat = jnp.ravel(x)
        pad = rows_valid * _LANES - n
        if pad:
            flat = jnp.pad(flat, (0, pad))
        return flat.reshape(rows_valid, _LANES)

    p2 = to_tiles(p)
    t2 = to_tiles(t)

    nbuf = _INPUT_BUFFERS if num_tiles >= _INPUT_BUFFERS else None
    kernel = functools.partial(_sq_diff_rowsum_kernel, tile_rows=tile_rows,
                               rows_valid=rows_valid, ragged=ragged)

    partials = pl.pallas_call(
        kernel,
        out_shape=jax.ShapeDtypeStruct((num_tiles, 1, _LANES), jnp.float32),
        grid=(num_tiles,),
        in_specs=[_make_in_spec(tile_rows, nbuf),
                  _make_in_spec(tile_rows, nbuf)],
        out_specs=pl.BlockSpec((1, 1, _LANES), lambda i: (i, 0, 0)),
        compiler_params=pltpu.CompilerParams(
            dimension_semantics=("parallel",),
            vmem_limit_bytes=_VMEM_LIMIT_BYTES),
    )(p2, t2)

    # Tiny final combine (num_tiles x 128 f32) -- fused by XLA.
    return jnp.sum(partials)


def my_loss3(sent_probs, doc_probs, event_probs,
             sent_targets, doc_targets, event_targets,
             alpha=1.0, beta=1.0,
             min_pallas_elems=_SMALL_FASTPATH_ELEMS,
             max_tile_rows=None):
    """Pallas equivalent of myLoss3.forward: (mse1 + a*mse2 + b*mse3)/(1+a+b)."""
    pairs = ((sent_probs, sent_targets),
             (doc_probs, doc_targets),
             (event_probs, event_targets))
    norm = 1.0 + alpha + beta

    total_elems = sum(int(p.size) for p, _ in pairs)
    if total_elems < min_pallas_elems:
        # Small-size fast path: a single fused XLA elementwise+reduce is
        # strictly cheaper than any kernel launch for tiny inputs.
        means = [jnp.mean((p.astype(jnp.float32) - t.astype(jnp.float32)) ** 2)
                 for p, t in pairs]
    else:
        means = []
        for p, t in pairs:
            n = int(p.size)
            if n == 0:
                # F.mse_loss on empty tensors returns NaN; mirror that.
                means.append(jnp.float32(jnp.nan))
            else:
                means.append(_stream_sq_diff_sum(p, t, max_tile_rows)
                             / jnp.float32(n))

    return (means[0] + alpha * means[1] + beta * means[2]) / norm


def _reference(sp, dp, ep, st, dt, et, alpha, beta):
    l1 = jnp.mean((sp.astype(jnp.float32) - st.astype(jnp.float32)) ** 2)
    l2 = jnp.mean((dp.astype(jnp.float32) - dt.astype(jnp.float32)) ** 2)
    l3 = jnp.mean((ep.astype(jnp.float32) - et.astype(jnp.float32)) ** 2)
    return (l1 + alpha * l2 + beta * l3) / (1.0 + alpha + beta)


if __name__ == "__main__":
    key = jax.random.PRNGKey(0)
    k = jax.random.split(key, 12)

    # --- test 1: tiny shapes implied by the forward, forced onto the kernel path ---
    sent_probs = jax.random.uniform(k[0], (2, 16), dtype=jnp.float32)
    doc_probs = jax.random.uniform(k[1], (2, 8), dtype=jnp.float32)
    event_probs = jax.random.uniform(k[2], (2, 4), dtype=jnp.float32)
    sent_targets = jax.random.uniform(k[3], (2, 16), dtype=jnp.float32)
    doc_targets = jax.random.uniform(k[4], (2, 8), dtype=jnp.float32)
    event_targets = jax.random.uniform(k[5], (2, 4), dtype=jnp.float32)

    loss = my_loss3(sent_probs, doc_probs, event_probs,
                    sent_targets, doc_targets, event_targets,
                    alpha=1.0, beta=1.0, min_pallas_elems=0)
    loss = jax.block_until_ready(loss)
    ref = _reference(sent_probs, doc_probs, event_probs,
                     sent_targets, doc_targets, event_targets, 1.0, 1.0)
    assert jnp.allclose(loss, ref, rtol=1e-5, atol=1e-6), (loss, ref)

    # --- test 2: multi-tile ragged grid + bf16 stream + non-trivial alpha/beta ---
    sp2 = jax.random.uniform(k[6], (20, 128), dtype=jnp.float32)   # ragged last block
    dp2 = jax.random.uniform(k[7], (4, 40), dtype=jnp.float32).astype(jnp.bfloat16)
    ep2 = jax.random.uniform(k[8], (2, 24), dtype=jnp.float32)
    st2 = jax.random.uniform(k[9], (20, 128), dtype=jnp.float32)
    dt2 = jax.random.uniform(k[10], (4, 40), dtype=jnp.float32).astype(jnp.bfloat16)
    et2 = jax.random.uniform(k[11], (2, 24), dtype=jnp.float32)

    loss2 = my_loss3(sp2, dp2, ep2, st2, dt2, et2,
                     alpha=0.5, beta=2.0, min_pallas_elems=0, max_tile_rows=16)
    loss2 = jax.block_until_ready(loss2)
    ref2 = _reference(sp2, dp2, ep2, st2, dt2, et2, 0.5, 2.0)
    assert jnp.allclose(loss2, ref2, rtol=1e-5, atol=1e-6), (loss2, ref2)

    # --- test 3: default small-size fast path (no kernel launch) ---
    loss3 = my_loss3(sent_probs, doc_probs, event_probs,
                     sent_targets, doc_targets, event_targets,
                     alpha=1.0, beta=1.0)
    loss3 = jax.block_until_ready(loss3)
    assert jnp.allclose(loss3, ref, rtol=1e-5, atol=1e-6), (loss3, ref)

    print("KERNEL_OK")
</pallas_src>

<mosaic_0001>
module attributes {stable_mosaic.version = 11 : i64} {
  func.func @_sq_diff_rowsum_kernel(%arg0: i32, %arg1: memref<8x128xf32, #tpu.memory_space<vmem>>, %arg2: memref<8x128xf32, #tpu.memory_space<vmem>>, %arg3: memref<1x1x128xf32, #tpu.memory_space<vmem>>) attributes {dimension_semantics = [#tpu.dimension_semantics<parallel>], iteration_bounds = array<i64: 1>, scalar_prefetch = 0 : i64, scratch_operands = 0 : i64, tpu.core_type = #tpu.core_type<tc>, window_params = [{transform_indices = @transform_0, window_bounds = array<i64: 8, 128>}, {transform_indices = @transform_1, window_bounds = array<i64: 8, 128>}, {transform_indices = @transform_2, window_bounds = array<i64: 1, 1, 128>}]} {
    %c0 = arith.constant 0 : index
    %c0_0 = arith.constant 0 : index
    %0 = vector.load %arg1[%c0, %c0_0] : memref<8x128xf32, #tpu.memory_space<vmem>>, vector<8x128xf32>
    %c0_1 = arith.constant 0 : index
    %c0_2 = arith.constant 0 : index
    %1 = vector.load %arg2[%c0_1, %c0_2] : memref<8x128xf32, #tpu.memory_space<vmem>>, vector<8x128xf32>
    %2 = arith.subf %0, %1 : vector<8x128xf32>
    %3 = arith.mulf %2, %2 : vector<8x128xf32>
    %cst = arith.constant dense<0.000000e+00> : vector<128xf32>
    %4 = vector.multi_reduction <add>, %3, %cst [0] : vector<8x128xf32> to vector<128xf32>
    %5 = vector.shape_cast %4 : vector<128xf32> to vector<1x1x128xf32>
    %c0_3 = arith.constant 0 : index
    %c0_4 = arith.constant 0 : index
    %c0_5 = arith.constant 0 : index
    %6 = vector.load %arg3[%c0_3, %c0_4, %c0_5] : memref<1x1x128xf32, #tpu.memory_space<vmem>>, vector<1x1x128xf32>
    tpu.vector_store %arg3[%c0_3, %c0_4, %c0_5], %5 {strides = array<i32>} : memref<1x1x128xf32, #tpu.memory_space<vmem>>, vector<1x1x128xf32>,
    return
  }
  func.func @transform_0(%arg0: i32) -> (i32, i32) {
    %c0_i32 = arith.constant 0 : i32
    %c0_i32_0 = arith.constant 0 : i32
    return %arg0, %c0_i32 : i32, i32
  }
  func.func @transform_1(%arg0: i32) -> (i32, i32) {
    %c0_i32 = arith.constant 0 : i32
    %c0_i32_0 = arith.constant 0 : i32
    return %arg0, %c0_i32 : i32, i32
  }
  func.func @transform_2(%arg0: i32) -> (i32, i32, i32) {
    %c0_i32 = arith.constant 0 : i32
    %c0_i32_0 = arith.constant 0 : i32
    %c0_i32_1 = arith.constant 0 : i32
    return %arg0, %c0_i32, %c0_i32_0 : i32, i32, i32
  }
}

</mosaic_0001>

<llo_original>
// kernel: tpu_custom_call.1
$region0: #{tpu_custom_call.1}
  #allocation0 [shape = 'u32[]', space=smem, size = 0x4, offset = 0x4, fixed_abs, tag = 'smem constant byte address 0x4 - core index']
  #allocation1 [shape = 'u32[72,128]{1,0:T(1,128)}', space=vmem, size = 0x9000, scoped, tag = 'internal scratch']
  %s0 = inlined_call_operand.hbm [shape: f32[8,128], index: 0, kind: input, shape index: {}]
  %s1 = inlined_call_operand.hbm [shape: f32[8,128], index: 1, kind: input, shape index: {}]
  %s2 = inlined_call_operand.hbm [shape: f32[1,1,128], index: 2, kind: output, shape index: {}]
  %s3 = sld [smem:[#allocation0]]
  $region26: #{tpu_custom_call.1} parent=0
    _
  %s5 = ssub.s32 1, %s3
  %s6 = scalar_select 0, %s5, %s3
  $region1: #{tpu_custom_call.1} parent=0
    #allocation2 [shape = 'u8[4096]{0}', space=vmem, size = 0x1000, scoped, tag = 'input window, operand 0, single buffered']
    #allocation3 [shape = 's32[1]{0}', space=sflag, size = 0x4, scoped, tag = 'scoped memory for tpu_custom_call.1']
    #allocation4 [shape = 's32[1]{0}', space=sflag, size = 0x4, scoped, tag = 'scoped memory for tpu_custom_call.1']
    #allocation5 [shape = 'u8[4096]{0}', space=vmem, size = 0x1000, scoped, tag = 'input window, operand 1, single buffered']
    #allocation6 [shape = 's32[1]{0}', space=sflag, size = 0x4, scoped, tag = 'scoped memory for tpu_custom_call.1']
    #allocation7 [shape = 'u8[512]{0}', space=vmem, size = 0x400, scoped, tag = 'output window, operand 0, single buffered']
    %7 = vsyncpa [#allocation3], 0
    %8 = vsyncpa [#allocation6], 0
    %9 = vsyncpa [#allocation4], 0
    // Predicated region
    $region2: #{tpu_custom_call.1} parent=1 // pred_check
      _
    $region3: #{tpu_custom_call.1} parent=1 // pred_check_branch
      %11 = sbr.rel (0) target = $region5
    $region4: #{tpu_custom_call.1} parent=1 // pred_region
      %13 = vsyncadd [#allocation3], 0
      %s15 = sshll.u32 %s0, 4
      %s16 = int_to_ptr.hbm [resolvable:$true] %s15
      %s17 = sshll.u32 [#allocation2], 4
      %s18 = int_to_ptr.vmem [resolvable:$true] %s17
      %20 = dma.hbm_to_vmem [thread:$0]  %s16, 128, %s18, [#allocation3]
    $region5: #{tpu_custom_call.1} parent=1 // pred_fallthru
      _
    // Predicated region
    $region6: #{tpu_custom_call.1} parent=1 // pred_check
      _
    $region7: #{tpu_custom_call.1} parent=1 // pred_check_branch
      %22 = sbr.rel (0) target = $region9
    $region8: #{tpu_custom_call.1} parent=1 // pred_region
      %24 = vsyncadd [#allocation6], 0
      %s26 = sshll.u32 %s1, 4
      %s27 = int_to_ptr.hbm [resolvable:$true] %s26
      %s28 = sshll.u32 [#allocation5], 4
      %s29 = int_to_ptr.vmem [resolvable:$true] %s28
      %31 = dma.hbm_to_vmem [thread:$0]  %s27, 128, %s29, [#allocation6]
    $region9: #{tpu_custom_call.1} parent=1 // pred_fallthru
      _
    // Predicated region
    $region10: #{tpu_custom_call.1} parent=1 // pred_check
      _
    $region11: #{tpu_custom_call.1} parent=1 // pred_check_branch
      %33 = sbr.rel (0) target = $region13
    $region12: #{tpu_custom_call.1} parent=1 // pred_region
      %35 = dma.done [#allocation3], 128
    $region13: #{tpu_custom_call.1} parent=1 // pred_fallthru
      _
    // Predicated region
    $region14: #{tpu_custom_call.1} parent=1 // pred_check
      _
    $region15: #{tpu_custom_call.1} parent=1 // pred_check_branch
      %37 = sbr.rel (0) target = $region17
    $region16: #{tpu_custom_call.1} parent=1 // pred_region
      %39 = dma.done [#allocation6], 128
    $region17: #{tpu_custom_call.1} parent=1 // pred_fallthru
      _
    %v40 = vld [vmem:[#allocation2] sm:$0xff]
    %v41 = vld [vmem:[#allocation5] sm:$0xff]
    %v42 = vsub.f32 %v40, %v41
    %v43 = vmul.f32 %v42, %v42
    %v44 = vrot.slane %v43, 4
    %v45 = vadd.f32 %v43, %v44
    %v46 = vrot.slane %v45, 2
    %v47 = vadd.f32 %v45, %v46
    %v48 = vrot.slane %v47, 1
    %v49 = vadd.f32 %v47, %v48
    %50 = vst [vmem:[#allocation7] sm:$0x1] %v49
    // Predicated region
    $region18: #{tpu_custom_call.1} parent=1 // pred_check
      _
    $region19: #{tpu_custom_call.1} parent=1 // pred_check_branch
      %52 = sbr.rel (0) target = $region21
    $region20: #{tpu_custom_call.1} parent=1 // pred_region
      %54 = vsyncadd [#allocation4], 0
      %s56 = sshll.u32 [#allocation7], 4
      %s57 = int_to_ptr.vmem [resolvable:$true] %s56
      %s58 = sshll.u32 %s2, 4
      %s59 = int_to_ptr.hbm [resolvable:$true] %s58
      %61 = dma.vmem_to_hbm [thread:$0]  %s57, 16, %s59, [#allocation4]
    $region21: #{tpu_custom_call.1} parent=1 // pred_fallthru
      _
    // Predicated region
    $region22: #{tpu_custom_call.1} parent=1 // pred_check
      _
    $region23: #{tpu_custom_call.1} parent=1 // pred_check_branch
      %63 = sbr.rel (0) target = $region25
    $region24: #{tpu_custom_call.1} parent=1 // pred_region
      %65 = dma.done [#allocation4], 16
    $region25: #{tpu_custom_call.1} parent=1 // pred_fallthru
      _
    %66 = vsyncpa [#allocation3], 1
    %67 = vsyncpa [#allocation6], 1
    %68 = vsyncpa [#allocation4], 1

</llo_original>
